<compile_context>
chip_gen: v5e
topology: v5e:2x2
jax: 0.10.0
libtpu: 0.0.40
codegen_flags: <defaults>
</compile_context>

<pallas_src>
import functools

import jax
import jax.numpy as jnp
from jax.experimental import pallas as pl
from jax.experimental.pallas import tpu as pltpu


def _round_up(n, m):
    return ((n + m - 1) // m) * m


# ----------------------------- Pallas kernel --------------------------------

def _fused_backbone_kernel(x_ref, ws_ref, bs_ref, w1_ref, b1_ref, w2_ref,
                           b2_ref, lhs_ref, pool_ref, acc_ref, *,
                           inv_hw, ts, hw, n_steps, needs_mask):
    """Stem + residual block + global-average-pool, fused.

    x_ref:    (1, ts, C_in_p)  bf16   one spatial tile of one batch element
    w*_ref:   bf16 weights / f32 biases, constant block index (resident in VMEM)
    lhs_ref:  (1, ts, C_p)     last_hidden_state tile (f32)
    pool_ref: (1, 1, 1, C_p)   per-(batch, chunk) partial pooled output
    acc_ref:  (1, C_p) f32 VMEM scratch — pool accumulator
    """
    p = pl.program_id(1)           # parallel spatial chunk
    s = pl.program_id(2)           # reduction step within the chunk

    x = x_ref[0]                                        # (ts, C_in_p) bf16

    # Stem: 1x1 conv (bf16 MXU, f32 acc) + bias + ReLU (all elementwise in f32).
    h = jnp.dot(x, ws_ref[...], preferred_element_type=jnp.float32) + bs_ref[...]
    h = jnp.maximum(h, 0.0)

    # Residual block; intermediates stay in VMEM/vregs, matmul operands bf16.
    h1 = jnp.dot(h.astype(w1_ref.dtype), w1_ref[...],
                 preferred_element_type=jnp.float32) + b1_ref[...]
    h1 = jnp.maximum(h1, 0.0)
    h2 = (jnp.dot(h1.astype(w2_ref.dtype), w2_ref[...],
                  preferred_element_type=jnp.float32) + b2_ref[...] + h)
    h2 = jnp.maximum(h2, 0.0)

    lhs_ref[0] = h2.astype(lhs_ref.dtype)

    # Global-average-pool: accumulate row sums in an f32 scratch, write the
    # output block once at the final reduction step.
    @pl.when(s == 0)
    def _():
        acc_ref[...] = jnp.zeros_like(acc_ref)

    if needs_mask:
        # Only generated when H*W doesn't divide the tile size: mask garbage
        # rows of the partial last tile out of the pool.
        tile_idx = p * n_steps + s
        row = tile_idx * ts + jax.lax.broadcasted_iota(jnp.int32, (ts, 1), 0)
        contrib = jnp.where(row < hw, h2, 0.0)
    else:
        contrib = h2
    acc_ref[...] += jnp.sum(contrib, axis=0, keepdims=True)

    @pl.when(s == n_steps - 1)
    def _():
        pool_ref[0, 0] = (acc_ref[...] * inv_hw).astype(pool_ref.dtype)


# ------------------------------- Wrapper -------------------------------------

def resnet_backbone_fused(x_nhwc, params, *, spatial_tile=1024):
    """x_nhwc: (B, HW, C_in) f32 -> (last_hidden_state (B, HW, C), pooled (B, C))."""
    B, HW, C_in = x_nhwc.shape
    C = params["w_stem"].shape[1]
    out_dtype = x_nhwc.dtype

    LANE = 128
    C_in_p = _round_up(C_in, LANE)
    C_p = _round_up(C, LANE)

    # Lane-dense, bf16 matmul operands. Zero padding is exact (padded channels
    # stay identically zero through conv+ReLU+residual) and is the identity at
    # real ResNet widths.
    x_p = jnp.pad(x_nhwc, ((0, 0), (0, 0), (0, C_in_p - C_in))).astype(jnp.bfloat16)
    w_stem = jnp.pad(params["w_stem"],
                     ((0, C_in_p - C_in), (0, C_p - C))).astype(jnp.bfloat16)
    w1 = jnp.pad(params["w1"], ((0, C_p - C), (0, C_p - C))).astype(jnp.bfloat16)
    w2 = jnp.pad(params["w2"], ((0, C_p - C), (0, C_p - C))).astype(jnp.bfloat16)
    b_stem = jnp.pad(params["b_stem"], ((0, 0), (0, C_p - C)))   # f32
    b1 = jnp.pad(params["b1"], ((0, 0), (0, C_p - C)))           # f32
    b2 = jnp.pad(params["b2"], ((0, 0), (0, C_p - C)))           # f32

    # Spatial tiling: fattest tile that fits; bf16 input -> multiple of 16
    # sublanes when not the full dim. Tail tiles handled via cdiv + masking.
    ts = min(spatial_tile, HW)
    if ts < HW:
        ts = max(16, (ts // 16) * 16)
    n_tiles = -(-HW // ts)
    needs_mask = (HW % ts) != 0

    # Megacore-friendly split: with B == 1 (typical CLIP inference) shard the
    # spatial axis across the 2 TensorCores on v7x via a parallel chunk axis.
    P = 2 if (B == 1 and n_tiles % 2 == 0 and n_tiles >= 2) else 1
    S = n_tiles // P

    kernel = functools.partial(
        _fused_backbone_kernel,
        inv_hw=1.0 / HW, ts=ts, hw=HW, n_steps=S, needs_mask=needs_mask)

    # Explicit VMEM budget (double-buffered tiles + resident weights + f32
    # temporaries), clamped well under v7x's 64 MiB physical per-TC VMEM.
    vmem_needed = (
        2 * ts * C_in_p * 2          # x tile, bf16, double-buffered
        + 2 * ts * C_p * 4           # lhs tile, f32, double-buffered
        + 2 * (C_in_p * C_p + 2 * C_p * C_p) * 2   # bf16 weights
        + 2 * 3 * C_p * 4            # biases
        + 2 * C_p * 4                # pool output block
        + 3 * ts * C_p * 4           # h / h1 / h2 f32 temporaries
        + (1 << 20))                 # slack
    vmem_limit = int(min(max(2 * vmem_needed, 8 << 20), 48 << 20))

    flops = 2 * B * HW * (C_in_p * C_p + 2 * C_p * C_p)
    bytes_accessed = (B * HW * C_in_p * 2 + B * HW * C_p * 4 + B * P * C_p * 4
                      + (C_in_p * C_p + 2 * C_p * C_p) * 2 + 3 * C_p * 4)

    const = lambda b, p, s: (0, 0)   # weights/biases: DMA'd once, VMEM-resident

    lhs_p, pool_p = pl.pallas_call(
        kernel,
        out_shape=(
            jax.ShapeDtypeStruct((B, HW, C_p), out_dtype),
            jax.ShapeDtypeStruct((B, P, 1, C_p), jnp.float32),
        ),
        grid=(B, P, S),
        in_specs=[
            pl.BlockSpec((1, ts, C_in_p), lambda b, p, s: (b, p * S + s, 0)),
            pl.BlockSpec((C_in_p, C_p), const),
            pl.BlockSpec((1, C_p), const),
            pl.BlockSpec((C_p, C_p), const),
            pl.BlockSpec((1, C_p), const),
            pl.BlockSpec((C_p, C_p), const),
            pl.BlockSpec((1, C_p), const),
        ],
        out_specs=(
            pl.BlockSpec((1, ts, C_p), lambda b, p, s: (b, p * S + s, 0)),
            pl.BlockSpec((1, 1, 1, C_p), lambda b, p, s: (b, p, 0, 0)),
        ),
        scratch_shapes=[pltpu.VMEM((1, C_p), jnp.float32)],
        compiler_params=pltpu.CompilerParams(
            dimension_semantics=("parallel", "parallel", "arbitrary"),
            vmem_limit_bytes=vmem_limit),
        cost_estimate=pl.CostEstimate(
            flops=flops, transcendentals=0, bytes_accessed=bytes_accessed),
    )(x_p, w_stem, b_stem, w1, b1, w2, b2)

    # Strip lane padding (identity when C is already a multiple of 128) and
    # combine the per-chunk partial pools (sum of partial means == global mean).
    last_hidden_state = lhs_p[:, :, :C]
    pooler_output = jnp.sum(pool_p, axis=1)[:, 0, :C].astype(out_dtype)
    return last_hidden_state, pooler_output


# --------------------------- Model (forward pass) ---------------------------

def init_params(key, c_in=4, c_hidden=32):
    """Deterministic synthetic 'ResNet' parameters (stem + 1 residual block)."""
    k1, k2, k3 = jax.random.split(key, 3)
    scale = 0.1
    return {
        "w_stem": scale * jax.random.normal(k1, (c_in, c_hidden), jnp.float32),
        "b_stem": jnp.zeros((1, c_hidden), jnp.float32),
        "w1": scale * jax.random.normal(k2, (c_hidden, c_hidden), jnp.float32),
        "b1": jnp.zeros((1, c_hidden), jnp.float32),
        "w2": scale * jax.random.normal(k3, (c_hidden, c_hidden), jnp.float32),
        "b2": jnp.zeros((1, c_hidden), jnp.float32),
    }
    # TODO(synk): BatchNorm of a real ResNet is folded conceptually into the
    # conv weights/bias here (inference-mode folding); no separate BN kernel.


def resnet_model_forward(pixel_values, params):
    """Equivalent of ResNetModel.forward.

    pixel_values: (B, C_in, H, W)  (NCHW, as in PyTorch)
    Returns:
      last_hidden_state: (B, H*W, C)
      pooler_output:     (B, C)
      hidden_states:     None
    """
    B, c_in, H, W = pixel_values.shape
    # NCHW -> NHWC flattened: tiny one-time XLA transpose that makes every 1x1
    # conv a plain MXU matmul and turns the module's
    # permute(0,2,3,1).reshape(B, H*W, C) into the identity.
    x = jnp.transpose(pixel_values, (0, 2, 3, 1)).reshape(B, H * W, c_in)

    last_hidden_state, pooler_output = resnet_backbone_fused(x, params)
    hidden_states = None  # module passes through outputs.hidden_states (None by default)
    return last_hidden_state, pooler_output, hidden_states


# ---------------------------------- Main -------------------------------------

if __name__ == "__main__":
    key = jax.random.PRNGKey(0)
    k_in, k_params = jax.random.split(key)

    B, C_IN, H, W = 2, 4, 16, 16
    C_HIDDEN = 32

    pixel_values = jax.random.normal(k_in, (B, C_IN, H, W), jnp.float32)
    params = init_params(k_params, c_in=C_IN, c_hidden=C_HIDDEN)

    fwd = jax.jit(resnet_model_forward)
    last_hidden_state, pooler_output, hidden_states = fwd(pixel_values, params)
    jax.block_until_ready((last_hidden_state, pooler_output))

    assert last_hidden_state.shape == (B, H * W, C_HIDDEN)
    assert pooler_output.shape == (B, C_HIDDEN)

    # Pure-JAX reference of the same synthetic backbone with the same bf16
    # matmul-operand / f32-accumulate policy the kernel uses.
    def bf16_mm(a, w):
        return jnp.dot(a.astype(jnp.bfloat16), w.astype(jnp.bfloat16),
                       preferred_element_type=jnp.float32)

    x_flat = jnp.transpose(pixel_values, (0, 2, 3, 1)).reshape(B * H * W, C_IN)
    h_ref = jnp.maximum(bf16_mm(x_flat, params["w_stem"]) + params["b_stem"], 0.0)
    h1_ref = jnp.maximum(bf16_mm(h_ref, params["w1"]) + params["b1"], 0.0)
    h2_ref = jnp.maximum(bf16_mm(h1_ref, params["w2"]) + params["b2"] + h_ref, 0.0)
    lhs_ref = h2_ref.reshape(B, H * W, C_HIDDEN)
    pool_ref = jnp.mean(lhs_ref, axis=1)

    assert jnp.allclose(last_hidden_state, lhs_ref, atol=5e-3, rtol=5e-3)
    assert jnp.allclose(pooler_output, pool_ref, atol=5e-3, rtol=5e-3)

    print("KERNEL_OK")
</pallas_src>

<mosaic_0001>
module attributes {stable_mosaic.version = 11 : i64} {
  func.func @_fused_backbone_kernel(%arg0: i32, %arg1: i32, %arg2: i32, %arg3: memref<1x256x128xbf16, #tpu.memory_space<vmem>>, %arg4: memref<128x128xbf16, #tpu.memory_space<vmem>>, %arg5: memref<1x128xf32, #tpu.memory_space<vmem>>, %arg6: memref<128x128xbf16, #tpu.memory_space<vmem>>, %arg7: memref<1x128xf32, #tpu.memory_space<vmem>>, %arg8: memref<128x128xbf16, #tpu.memory_space<vmem>>, %arg9: memref<1x128xf32, #tpu.memory_space<vmem>>, %arg10: memref<1x256x128xf32, #tpu.memory_space<vmem>>, %arg11: memref<1x1x1x128xf32, #tpu.memory_space<vmem>>, %arg12: memref<1x128xf32, #tpu.memory_space<vmem>>) attributes {dimension_semantics = [#tpu.dimension_semantics<parallel>, #tpu.dimension_semantics<parallel>, #tpu.dimension_semantics<arbitrary>], iteration_bounds = array<i64: 2, 1, 1>, scalar_prefetch = 0 : i64, scratch_operands = 1 : i64, tpu.core_type = #tpu.core_type<tc>, window_params = [{transform_indices = @transform_0, window_bounds = array<i64: 1, 256, 128>}, {pipeline_mode = #tpu.pipeline_mode<synchronous>, transform_indices = @transform_1, window_bounds = array<i64: 128, 128>}, {pipeline_mode = #tpu.pipeline_mode<synchronous>, transform_indices = @transform_2, window_bounds = array<i64: 1, 128>}, {pipeline_mode = #tpu.pipeline_mode<synchronous>, transform_indices = @transform_3, window_bounds = array<i64: 128, 128>}, {pipeline_mode = #tpu.pipeline_mode<synchronous>, transform_indices = @transform_4, window_bounds = array<i64: 1, 128>}, {pipeline_mode = #tpu.pipeline_mode<synchronous>, transform_indices = @transform_5, window_bounds = array<i64: 128, 128>}, {pipeline_mode = #tpu.pipeline_mode<synchronous>, transform_indices = @transform_6, window_bounds = array<i64: 1, 128>}, {transform_indices = @transform_7, window_bounds = array<i64: 1, 256, 128>}, {transform_indices = @transform_8, window_bounds = array<i64: 1, 1, 1, 128>}]} {
    %c0 = arith.constant 0 : index
    %c0_0 = arith.constant 0 : index
    %c0_1 = arith.constant 0 : index
    %0 = vector.load %arg3[%c0, %c0_0, %c0_1] : memref<1x256x128xbf16, #tpu.memory_space<vmem>>, vector<1x256x128xbf16>
    %1 = vector.shape_cast %0 : vector<1x256x128xbf16> to vector<256x128xbf16>
    %c0_2 = arith.constant 0 : index
    %c0_3 = arith.constant 0 : index
    %2 = vector.load %arg4[%c0_2, %c0_3] : memref<128x128xbf16, #tpu.memory_space<vmem>>, vector<128x128xbf16>
    %cst = arith.constant dense<0.000000e+00> : vector<256x128xf32>
    %3 = tpu.matmul %1, %2, %cst {dimension_numbers = #tpu.dot_dimension_numbers<[1], [0], [0], [1], [0, 0, 1, 1], [], []>} : vector<256x128xbf16>, vector<128x128xbf16>, vector<256x128xf32> -> vector<256x128xf32>
    %c0_4 = arith.constant 0 : index
    %c0_5 = arith.constant 0 : index
    %4 = vector.load %arg5[%c0_4, %c0_5] : memref<1x128xf32, #tpu.memory_space<vmem>>, vector<1x128xf32>
    %5 = vector.broadcast %4 : vector<1x128xf32> to vector<256x128xf32>
    %6 = arith.addf %3, %5 : vector<256x128xf32>
    %cst_6 = arith.constant 0.000000e+00 : f32
    %7 = vector.broadcast %cst_6 : f32 to vector<256x128xf32>
    %8 = arith.maximumf %6, %7 : vector<256x128xf32>
    %9 = arith.truncf %8 : vector<256x128xf32> to vector<256x128xbf16>
    %c0_7 = arith.constant 0 : index
    %c0_8 = arith.constant 0 : index
    %10 = vector.load %arg6[%c0_7, %c0_8] : memref<128x128xbf16, #tpu.memory_space<vmem>>, vector<128x128xbf16>
    %cst_9 = arith.constant dense<0.000000e+00> : vector<256x128xf32>
    %11 = tpu.matmul %9, %10, %cst_9 {dimension_numbers = #tpu.dot_dimension_numbers<[1], [0], [0], [1], [0, 0, 1, 1], [], []>} : vector<256x128xbf16>, vector<128x128xbf16>, vector<256x128xf32> -> vector<256x128xf32>
    %c0_10 = arith.constant 0 : index
    %c0_11 = arith.constant 0 : index
    %12 = vector.load %arg7[%c0_10, %c0_11] : memref<1x128xf32, #tpu.memory_space<vmem>>, vector<1x128xf32>
    %13 = vector.broadcast %12 : vector<1x128xf32> to vector<256x128xf32>
    %14 = arith.addf %11, %13 : vector<256x128xf32>
    %cst_12 = arith.constant 0.000000e+00 : f32
    %15 = vector.broadcast %cst_12 : f32 to vector<256x128xf32>
    %16 = arith.maximumf %14, %15 : vector<256x128xf32>
    %17 = arith.truncf %16 : vector<256x128xf32> to vector<256x128xbf16>
    %c0_13 = arith.constant 0 : index
    %c0_14 = arith.constant 0 : index
    %18 = vector.load %arg8[%c0_13, %c0_14] : memref<128x128xbf16, #tpu.memory_space<vmem>>, vector<128x128xbf16>
    %cst_15 = arith.constant dense<0.000000e+00> : vector<256x128xf32>
    %19 = tpu.matmul %17, %18, %cst_15 {dimension_numbers = #tpu.dot_dimension_numbers<[1], [0], [0], [1], [0, 0, 1, 1], [], []>} : vector<256x128xbf16>, vector<128x128xbf16>, vector<256x128xf32> -> vector<256x128xf32>
    %c0_16 = arith.constant 0 : index
    %c0_17 = arith.constant 0 : index
    %20 = vector.load %arg9[%c0_16, %c0_17] : memref<1x128xf32, #tpu.memory_space<vmem>>, vector<1x128xf32>
    %21 = vector.broadcast %20 : vector<1x128xf32> to vector<256x128xf32>
    %22 = arith.addf %19, %21 : vector<256x128xf32>
    %23 = arith.addf %22, %8 : vector<256x128xf32>
    %cst_18 = arith.constant 0.000000e+00 : f32
    %24 = vector.broadcast %cst_18 : f32 to vector<256x128xf32>
    %25 = arith.maximumf %23, %24 : vector<256x128xf32>
    %c0_19 = arith.constant 0 : index
    %c0_20 = arith.constant 0 : index
    %c0_21 = arith.constant 0 : index
    %26 = vector.load %arg10[%c0_19, %c0_20, %c0_21] : memref<1x256x128xf32, #tpu.memory_space<vmem>>, vector<1x256x128xf32>
    %27 = vector.shape_cast %26 : vector<1x256x128xf32> to vector<256x128xf32>
    %28 = vector.shape_cast %25 : vector<256x128xf32> to vector<1x256x128xf32>
    tpu.vector_store %arg10[%c0_19, %c0_20, %c0_21], %28 {strides = array<i32>} : memref<1x256x128xf32, #tpu.memory_space<vmem>>, vector<1x256x128xf32>,
    %c0_i32 = arith.constant 0 : i32
    %29 = arith.cmpi eq, %arg2, %c0_i32 : i32
    %30 = arith.extui %29 : i1 to i32
    %c0_i32_22 = arith.constant 0 : i32
    %31 = arith.cmpi ne, %30, %c0_i32_22 : i32
    scf.if %31 {
      %cst_30 = arith.constant 0.000000e+00 : f32
      %40 = vector.broadcast %cst_30 : f32 to vector<1x128xf32>
      %c0_31 = arith.constant 0 : index
      %c0_32 = arith.constant 0 : index
      %41 = vector.load %arg12[%c0_31, %c0_32] : memref<1x128xf32, #tpu.memory_space<vmem>>, vector<1x128xf32>
      tpu.vector_store %arg12[%c0_31, %c0_32], %40 {strides = array<i32>} : memref<1x128xf32, #tpu.memory_space<vmem>>, vector<1x128xf32>,
    } else {
    }
    %c0_23 = arith.constant 0 : index
    %c0_24 = arith.constant 0 : index
    %32 = vector.load %arg12[%c0_23, %c0_24] : memref<1x128xf32, #tpu.memory_space<vmem>>, vector<1x128xf32>
    %cst_25 = arith.constant dense<0.000000e+00> : vector<128xf32>
    %33 = vector.multi_reduction <add>, %25, %cst_25 [0] : vector<256x128xf32> to vector<128xf32>
    %34 = vector.shape_cast %33 : vector<128xf32> to vector<1x128xf32>
    %35 = arith.addf %32, %34 : vector<1x128xf32>
    %c0_26 = arith.constant 0 : index
    %c0_27 = arith.constant 0 : index
    %36 = vector.load %arg12[%c0_26, %c0_27] : memref<1x128xf32, #tpu.memory_space<vmem>>, vector<1x128xf32>
    tpu.vector_store %arg12[%c0_26, %c0_27], %35 {strides = array<i32>} : memref<1x128xf32, #tpu.memory_space<vmem>>, vector<1x128xf32>,
    %c0_i32_28 = arith.constant 0 : i32
    %37 = arith.cmpi eq, %arg2, %c0_i32_28 : i32
    %38 = arith.extui %37 : i1 to i32
    %c0_i32_29 = arith.constant 0 : i32
    %39 = arith.cmpi ne, %38, %c0_i32_29 : i32
    scf.if %39 {
      %c0_30 = arith.constant 0 : index
      %c0_31 = arith.constant 0 : index
      %40 = vector.load %arg12[%c0_30, %c0_31] : memref<1x128xf32, #tpu.memory_space<vmem>>, vector<1x128xf32>
      %cst_32 = arith.constant 3.906250e-03 : f32
      %41 = vector.broadcast %cst_32 : f32 to vector<1x128xf32>
      %42 = arith.mulf %40, %41 : vector<1x128xf32>
      %c0_33 = arith.constant 0 : index
      %c0_34 = arith.constant 0 : index
      %c0_35 = arith.constant 0 : index
      %c0_36 = arith.constant 0 : index
      %43 = vector.load %arg11[%c0_33, %c0_34, %c0_35, %c0_36] : memref<1x1x1x128xf32, #tpu.memory_space<vmem>>, vector<1x1x1x128xf32>
      %44 = vector.shape_cast %43 : vector<1x1x1x128xf32> to vector<1x128xf32>
      %45 = vector.shape_cast %42 : vector<1x128xf32> to vector<1x1x1x128xf32>
      tpu.vector_store %arg11[%c0_33, %c0_34, %c0_35, %c0_36], %45 {strides = array<i32>} : memref<1x1x1x128xf32, #tpu.memory_space<vmem>>, vector<1x1x1x128xf32>,
    } else {
    }
    return
  }
  func.func @transform_0(%arg0: i32, %arg1: i32, %arg2: i32) -> (i32, i32, i32) {
    %c1_i32 = arith.constant 1 : i32
    %0 = arith.muli %arg1, %c1_i32 : i32
    %1 = arith.addi %0, %arg2 : i32
    %c0_i32 = arith.constant 0 : i32
    %c0_i32_0 = arith.constant 0 : i32
    return %arg0, %1, %c0_i32 : i32, i32, i32
  }
  func.func @transform_1(%arg0: i32, %arg1: i32, %arg2: i32) -> (i32, i32) {
    %c0_i32 = arith.constant 0 : i32
    %c0_i32_0 = arith.constant 0 : i32
    %c0_i32_1 = arith.constant 0 : i32
    return %c0_i32, %c0_i32_0 : i32, i32
  }
  func.func @transform_2(%arg0: i32, %arg1: i32, %arg2: i32) -> (i32, i32) {
    %c0_i32 = arith.constant 0 : i32
    %c0_i32_0 = arith.constant 0 : i32
    %c0_i32_1 = arith.constant 0 : i32
    return %c0_i32, %c0_i32_0 : i32, i32
  }
  func.func @transform_3(%arg0: i32, %arg1: i32, %arg2: i32) -> (i32, i32) {
    %c0_i32 = arith.constant 0 : i32
    %c0_i32_0 = arith.constant 0 : i32
    %c0_i32_1 = arith.constant 0 : i32
    return %c0_i32, %c0_i32_0 : i32, i32
  }
  func.func @transform_4(%arg0: i32, %arg1: i32, %arg2: i32) -> (i32, i32) {
    %c0_i32 = arith.constant 0 : i32
    %c0_i32_0 = arith.constant 0 : i32
    %c0_i32_1 = arith.constant 0 : i32
    return %c0_i32, %c0_i32_0 : i32, i32
  }
  func.func @transform_5(%arg0: i32, %arg1: i32, %arg2: i32) -> (i32, i32) {
    %c0_i32 = arith.constant 0 : i32
    %c0_i32_0 = arith.constant 0 : i32
    %c0_i32_1 = arith.constant 0 : i32
    return %c0_i32, %c0_i32_0 : i32, i32
  }
  func.func @transform_6(%arg0: i32, %arg1: i32, %arg2: i32) -> (i32, i32) {
    %c0_i32 = arith.constant 0 : i32
    %c0_i32_0 = arith.constant 0 : i32
    %c0_i32_1 = arith.constant 0 : i32
    return %c0_i32, %c0_i32_0 : i32, i32
  }
  func.func @transform_7(%arg0: i32, %arg1: i32, %arg2: i32) -> (i32, i32, i32) {
    %c1_i32 = arith.constant 1 : i32
    %0 = arith.muli %arg1, %c1_i32 : i32
    %1 = arith.addi %0, %arg2 : i32
    %c0_i32 = arith.constant 0 : i32
    %c0_i32_0 = arith.constant 0 : i32
    return %arg0, %1, %c0_i32 : i32, i32, i32
  }
  func.func @transform_8(%arg0: i32, %arg1: i32, %arg2: i32) -> (i32, i32, i32, i32) {
    %c0_i32 = arith.constant 0 : i32
    %c0_i32_0 = arith.constant 0 : i32
    %c0_i32_1 = arith.constant 0 : i32
    return %arg0, %arg1, %c0_i32, %c0_i32_0 : i32, i32, i32, i32
  }
}

</mosaic_0001>

<llo_original>
// kernel: resnet_model_forward.1
$region0: #{resnet_model_forward.1}
  #allocation0 [shape = 'u32[]', space=smem, size = 0x4, offset = 0x4, fixed_abs, tag = 'smem constant byte address 0x4 - core index']
  #allocation1 [shape = 'u32[72,128]{1,0:T(1,128)}', space=vmem, size = 0x9000, scoped, tag = 'internal scratch']
  #allocation2 [shape = 'f32[1,128]{1,0:T(1,128)}', space=vmem, size = 0x200, scoped, tag = 'scratch operand']
  %s0 = inlined_call_operand.vmem [shape: bf16[2,256,128], index: 0, kind: input, shape index: {}]
  %s1 = inlined_call_operand.vmem [shape: bf16[128,128], index: 1, kind: input, shape index: {}]
  %s2 = inlined_call_operand.vmem [shape: f32[1,128], index: 2, kind: input, shape index: {}]
  %s3 = inlined_call_operand.vmem [shape: bf16[128,128], index: 3, kind: input, shape index: {}]
  %s4 = inlined_call_operand.vmem [shape: f32[1,128], index: 4, kind: input, shape index: {}]
  %s5 = inlined_call_operand.vmem [shape: bf16[128,128], index: 5, kind: input, shape index: {}]
  %s6 = inlined_call_operand.vmem [shape: f32[1,128], index: 6, kind: input, shape index: {}]
  %s7 = inlined_call_operand.vmem [shape: f32[2,256,128], index: 7, kind: output, shape index: {0}]
  %s8 = inlined_call_operand.vmem [shape: f32[2,1,1,128], index: 8, kind: output, shape index: {1}]
  %9 = xla_tuple %s7, %s8
  %s10 = sld [smem:[#allocation0]]
  $region77: #{resnet_model_forward.1} parent=0
    _
  %s12 = ssub.s32 1, %s10
  %s13 = scalar_select 0, %s12, %s10
  loop: start=0, step=1, limit=4
  $region2: #{resnet_model_forward.1} parent=0 // loop_pre_header
    _
  $region3: #{resnet_model_forward.1} parent=0 // loop_header
    %s15 = sphi 0, %s19
    %p16 = scmp.ge.s32.totalorder %s15, 4
    %s22 = sphi 0, %s41
    %s23 = sphi 0, %s37
    %s24 = sphi 0, %s33
    %s25 = sphi 0, %s22
    %s26 = sphi 0, %s23
    %s27 = sphi 0, %s24
    %s28 = sphi 0, %s25
    %s29 = sphi 0, %s26
    %s30 = sphi 0, %s27
    %s48 = sphi 0, %s50
    %s51 = sphi 0, %s48
    %s52 = sphi 0, %s51
    %s68 = sphi 0, %s52
    %s72 = sphi 0, %s72
    %s74 = sphi 0, %s72
    %s75 = sphi 0, %s74
    %s89 = sphi 0, %s75
    %s93 = sphi 0, %s93
    %s95 = sphi 0, %s93
    %s96 = sphi 0, %s95
    %s110 = sphi 0, %s96
    %s114 = sphi 0, %s114
    %s116 = sphi 0, %s114
    %s117 = sphi 0, %s116
    %s131 = sphi 0, %s117
    %s135 = sphi 0, %s135
    %s137 = sphi 0, %s135
    %s138 = sphi 0, %s137
    %s152 = sphi 0, %s138
    %s156 = sphi 0, %s156
    %s158 = sphi 0, %s156
    %s159 = sphi 0, %s158
    %s173 = sphi 0, %s159
    %s177 = sphi 0, %s177
    %s179 = sphi 0, %s177
    %s180 = sphi 0, %s179
    %s194 = sphi 0, %s180
    %s204 = sphi 0, %s206
    %s207 = sphi 0, %s204
    %s208 = sphi 0, %s207
    %s224 = sphi 0, %s208
    %s232 = sphi 0, %s234
    %s235 = sphi 0, %s232
    %s236 = sphi 0, %s235
    %s252 = sphi 0, %s236
  $region4: #{resnet_model_forward.1} parent=0 // loop_header_branch
    %18 = sbr.rel (%p16) target = $region8
  $region5: #{resnet_model_forward.1} parent=0 // loop_body
    %s20 = ssub.s32 %s15, 1
    %s21 = ssub.s32 %s15, 2
    %s31 = sadd.s32 1, %s24
    %p32 = scmp.ge.s32.totalorder %s31, 1
    %s33 = scalar_select %p32, 0, %s31
    %s34 = sadd.s32 1, %s23
    %s35 = scalar_select %p32, %s34, %s23
    %p36 = scmp.ge.s32.totalorder %s35, 1
    %s37 = scalar_select %p36, 0, %s35
    %s38 = sadd.s32 1, %s22
    %s39 = scalar_select %p36, %s38, %s22
    %p40 = scmp.ge.s32.totalorder %s39, 2
    %s41 = scalar_select %p40, 0, %s39
    %s42 = sadd.s32 %s23, %s24
    %s43 = sadd.s32 %s37, %s33
    %s44 = ssub.s32 %s22, %s41
    %s45 = ssub.s32 %s42, %s43
    %s46 = sor.u32 %s44, %s45
    %p47 = scmp.eq.s32.totalorder %s46, 0
    %s49 = sadd.s32 %s48, 1
    %s50 = scalar_select %p47, %s48, %s49
    %p53 = pneg %p47
    %p54 = scmp.eq.s32.totalorder %s15, 1
    %p55 = por %p53, %p54
    %p56 = scmp.ne.s32.totalorder %s48, %s51
    %p57 = scmp.eq.s32.totalorder %s15, 0
    %p58 = por %p56, %p57
    %p59 = scmp.ne.s32.totalorder %s48, %s51
    %p60 = scmp.eq.s32.totalorder %s20, 1
    %p61 = por %p59, %p60
    %p62 = scmp.ne.s32.totalorder %s51, %s52
    %p63 = scmp.eq.s32.totalorder %s20, 0
    %p64 = por %p62, %p63
    %p65 = scmp.ne.s32.totalorder %s51, %s52
    %p66 = scmp.eq.s32.totalorder %s21, 1
    %p67 = por %p65, %p66
    %p69 = scmp.ne.s32.totalorder %s52, %s68
    %p70 = scmp.eq.s32.totalorder %s21, 0
    %p71 = por %p69, %p70
    %s73 = sadd.s32 %s72, 1
    %p76 = scmp.eq.s32.totalorder %s15, 1
    %p77 = scmp.ne.s32.totalorder %s72, %s74
    %p78 = scmp.eq.s32.totalorder %s15, 0
    %p79 = por %p77, %p78
    %p80 = scmp.ne.s32.totalorder %s72, %s74
    %p81 = scmp.eq.s32.totalorder %s20, 1
    %p82 = por %p80, %p81
    %p83 = scmp.ne.s32.totalorder %s74, %s75
    %p84 = scmp.eq.s32.totalorder %s20, 0
    %p85 = por %p83, %p84
    %p86 = scmp.ne.s32.totalorder %s74, %s75
    %p87 = scmp.eq.s32.totalorder %s21, 1
    %p88 = por %p86, %p87
    %p90 = scmp.ne.s32.totalorder %s75, %s89
    %p91 = scmp.eq.s32.totalorder %s21, 0
    %p92 = por %p90, %p91
    %s94 = sadd.s32 %s93, 1
    %p97 = scmp.eq.s32.totalorder %s15, 1
    %p98 = scmp.ne.s32.totalorder %s93, %s95
    %p99 = scmp.eq.s32.totalorder %s15, 0
    %p100 = por %p98, %p99
    %p101 = scmp.ne.s32.totalorder %s93, %s95
    %p102 = scmp.eq.s32.totalorder %s20, 1
    %p103 = por %p101, %p102
    %p104 = scmp.ne.s32.totalorder %s95, %s96
    %p105 = scmp.eq.s32.totalorder %s20, 0
    %p106 = por %p104, %p105
    %p107 = scmp.ne.s32.totalorder %s95, %s96
    %p108 = scmp.eq.s32.totalorder %s21, 1
    %p109 = por %p107, %p108
    %p111 = scmp.ne.s32.totalorder %s96, %s110
    %p112 = scmp.eq.s32.totalorder %s21, 0
    %p113 = por %p111, %p112
    %s115 = sadd.s32 %s114, 1
    %p118 = scmp.eq.s32.totalorder %s15, 1
    %p119 = scmp.ne.s32.totalorder %s114, %s116
    %p120 = scmp.eq.s32.totalorder %s15, 0
    %p121 = por %p119, %p120
    %p122 = scmp.ne.s32.totalorder %s114, %s116
    %p123 = scmp.eq.s32.totalorder %s20, 1
    %p124 = por %p122, %p123
    %p125 = scmp.ne.s32.totalorder %s116, %s117
    %p126 = scmp.eq.s32.totalorder %s20, 0
    %p127 = por %p125, %p126
    %p128 = scmp.ne.s32.totalorder %s116, %s117
    %p129 = scmp.eq.s32.totalorder %s21, 1
    %p130 = por %p128, %p129
    %p132 = scmp.ne.s32.totalorder %s117, %s131
    %p133 = scmp.eq.s32.totalorder %s21, 0
    %p134 = por %p132, %p133
    %s136 = sadd.s32 %s135, 1
    %p139 = scmp.eq.s32.totalorder %s15, 1
    %p140 = scmp.ne.s32.totalorder %s135, %s137
    %p141 = scmp.eq.s32.totalorder %s15, 0
    %p142 = por %p140, %p141
    %p143 = scmp.ne.s32.totalorder %s135, %s137
    %p144 = scmp.eq.s32.totalorder %s20, 1
    %p145 = por %p143, %p144
    %p146 = scmp.ne.s32.totalorder %s137, %s138
    %p147 = scmp.eq.s32.totalorder %s20, 0
    %p148 = por %p146, %p147
    %p149 = scmp.ne.s32.totalorder %s137, %s138
    %p150 = scmp.eq.s32.totalorder %s21, 1
    %p151 = por %p149, %p150
    %p153 = scmp.ne.s32.totalorder %s138, %s152
    %p154 = scmp.eq.s32.totalorder %s21, 0
    %p155 = por %p153, %p154
    %s157 = sadd.s32 %s156, 1
    %p160 = scmp.eq.s32.totalorder %s15, 1
    %p161 = scmp.ne.s32.totalorder %s156, %s158
    %p162 = scmp.eq.s32.totalorder %s15, 0
    %p163 = por %p161, %p162
    %p164 = scmp.ne.s32.totalorder %s156, %s158
    %p165 = scmp.eq.s32.totalorder %s20, 1
    %p166 = por %p164, %p165
    %p167 = scmp.ne.s32.totalorder %s158, %s159
    %p168 = scmp.eq.s32.totalorder %s20, 0
    %p169 = por %p167, %p168
    %p170 = scmp.ne.s32.totalorder %s158, %s159
    %p171 = scmp.eq.s32.totalorder %s21, 1
    %p172 = por %p170, %p171
    %p174 = scmp.ne.s32.totalorder %s159, %s173
    %p175 = scmp.eq.s32.totalorder %s21, 0
    %p176 = por %p174, %p175
    %s178 = sadd.s32 %s177, 1
    %p181 = scmp.eq.s32.totalorder %s15, 1
    %p182 = scmp.ne.s32.totalorder %s177, %s179
    %p183 = scmp.eq.s32.totalorder %s15, 0
    %p184 = por %p182, %p183
    %p185 = scmp.ne.s32.totalorder %s177, %s179
    %p186 = scmp.eq.s32.totalorder %s20, 1
    %p187 = por %p185, %p186
    %p188 = scmp.ne.s32.totalorder %s179, %s180
    %p189 = scmp.eq.s32.totalorder %s20, 0
    %p190 = por %p188, %p189
    %p191 = scmp.ne.s32.totalorder %s179, %s180
    %p192 = scmp.eq.s32.totalorder %s21, 1
    %p193 = por %p191, %p192
    %p195 = scmp.ne.s32.totalorder %s180, %s194
    %p196 = scmp.eq.s32.totalorder %s21, 0
    %p197 = por %p195, %p196
    %s198 = sadd.s32 %s23, %s24
    %s199 = sadd.s32 %s37, %s33
    %s200 = ssub.s32 %s22, %s41
    %s201 = ssub.s32 %s198, %s199
    %s202 = sor.u32 %s200, %s201
    %p203 = scmp.eq.s32.totalorder %s202, 0
    %s205 = sadd.s32 %s204, 1
    %s206 = scalar_select %p203, %s204, %s205
    %p209 = pneg %p203
    %p210 = scmp.eq.s32.totalorder %s15, 1
    %p211 = por %p209, %p210
    %p212 = scmp.ne.s32.totalorder %s204, %s207
    %p213 = scmp.eq.s32.totalorder %s15, 0
    %p214 = por %p212, %p213
    %p215 = scmp.ne.s32.totalorder %s204, %s207
    %p216 = scmp.eq.s32.totalorder %s20, 1
    %p217 = por %p215, %p216
    %p218 = scmp.ne.s32.totalorder %s207, %s208
    %p219 = scmp.eq.s32.totalorder %s20, 0
    %p220 = por %p218, %p219
    %p221 = scmp.ne.s32.totalorder %s207, %s208
    %p222 = scmp.eq.s32.totalorder %s21, 1
    %p223 = por %p221, %p222
    %p225 = scmp.ne.s32.totalorder %s208, %s224
    %p226 = scmp.eq.s32.totalorder %s21, 0
    %p227 = por %p225, %p226
    %s228 = ssub.s32 %s22, %s41
    %s229 = ssub.s32 %s23, %s37
    %s230 = sor.u32 %s228, %s229
    %p231 = scmp.eq.s32.totalorder %s230, 0
    %s233 = sadd.s32 %s232, 1
    %s234 = scalar_select %p231, %s232, %s233
    %p237 = pneg %p231
    %p238 = scmp.eq.s32.totalorder %s15, 1
    %p239 = por %p237, %p238
    %p240 = scmp.ne.s32.totalorder %s232, %s235
    %p241 = scmp.eq.s32.totalorder %s15, 0
    %p242 = por %p240, %p241
    %p243 = scmp.ne.s32.totalorder %s232, %s235
    %p244 = scmp.eq.s32.totalorder %s20, 1
    %p245 = por %p243, %p244
    %p246 = scmp.ne.s32.totalorder %s235, %s236
    %p247 = scmp.eq.s32.totalorder %s20, 0
    %p248 = por %p246, %p247
    %p249 = scmp.ne.s32.totalorder %s235, %s236
    %p250 = scmp.eq.s32.totalorder %s21, 1
    %p251 = por %p249, %p250
    %p253 = scmp.ne.s32.totalorder %s236, %s252
    %p254 = scmp.eq.s32.totalorder %s21, 0
    %p255 = por %p253, %p254
    %p256 = scmp.le.s32.totalorder 1, %s15
    %p257 = scmp.lt.s32.totalorder %s15, 3
    %p258 = pnand %p256, %p257
    %p259 = pneg %p258
    // Predicated region
    $region9: #{resnet_model_forward.1} parent=5 // pred_check
      _
    $region10: #{resnet_model_forward.1} parent=5 // pred_check_branch
      %261 = sbr.rel (%p258) target = $region12
    $region11: #{resnet_model_forward.1} parent=5 // pred_region
      %s262 = ssub.s32 %s15, 1
      // Predicated region
      $region13: #{resnet_model_forward.1} parent=11 // pred_check
        %p263 = pneg %p85
      $region14: #{resnet_model_forward.1} parent=11 // pred_check_branch
        %265 = sbr.rel (%p263) target = $region16
      $region15: #{resnet_model_forward.1} parent=11 // pred_region
        _
      $region16: #{resnet_model_forward.1} parent=11 // pred_fallthru
        _
      // Predicated region
      $region17: #{resnet_model_forward.1} parent=11 // pred_check
        %p266 = pneg %p106
      $region18: #{resnet_model_forward.1} parent=11 // pred_check_branch
        %268 = sbr.rel (%p266) target = $region20
      $region19: #{resnet_model_forward.1} parent=11 // pred_region
        _
      $region20: #{resnet_model_forward.1} parent=11 // pred_fallthru
        _
      // Predicated region
      $region21: #{resnet_model_forward.1} parent=11 // pred_check
        %p269 = pneg %p127
      $region22: #{resnet_model_forward.1} parent=11 // pred_check_branch
        %271 = sbr.rel (%p269) target = $region24
      $region23: #{resnet_model_forward.1} parent=11 // pred_region
        _
      $region24: #{resnet_model_forward.1} parent=11 // pred_fallthru
        _
      // Predicated region
      $region25: #{resnet_model_forward.1} parent=11 // pred_check
        %p272 = pneg %p148
      $region26: #{resnet_model_forward.1} parent=11 // pred_check_branch
        %274 = sbr.rel (%p272) target = $region28
      $region27: #{resnet_model_forward.1} parent=11 // pred_region
        _
      $region28: #{resnet_model_forward.1} parent=11 // pred_fallthru
        _
      // Predicated region
      $region29: #{resnet_model_forward.1} parent=11 // pred_check
        %p275 = pneg %p169
      $region30: #{resnet_model_forward.1} parent=11 // pred_check_branch
        %277 = sbr.rel (%p275) target = $region32
      $region31: #{resnet_model_forward.1} parent=11 // pred_region
        _
      $region32: #{resnet_model_forward.1} parent=11 // pred_fallthru
        _
      // Predicated region
      $region33: #{resnet_model_forward.1} parent=11 // pred_check
        %p278 = pneg %p190
      $region34: #{resnet_model_forward.1} parent=11 // pred_check_branch
        %280 = sbr.rel (%p278) target = $region36
      $region35: #{resnet_model_forward.1} parent=11 // pred_region
        _
      $region36: #{resnet_model_forward.1} parent=11 // pred_fallthru
        _
    $region12: #{resnet_model_forward.1} parent=5 // pred_fallthru
      _
    %p281 = scmp.lt.s32.totalorder %s15, 2
    // Predicated region
    $region37: #{resnet_model_forward.1} parent=5 // pred_check
      %p282 = pneg %p281
    $region38: #{resnet_model_forward.1} parent=5 // pred_check_branch
      %284 = sbr.rel (%p282) target = $region40
    $region39: #{resnet_model_forward.1} parent=5 // pred_region
      // Predicated region
      $region41: #{resnet_model_forward.1} parent=39 // pred_check
        %p285 = pneg %p58
      $region42: #{resnet_model_forward.1} parent=39 // pred_check_branch
        %287 = sbr.rel (%p285) target = $region44
      $region43: #{resnet_model_forward.1} parent=39 // pred_region
        %s288 = sadd.s32 %s23, %s24
        %s289 = smul.u32 32, %s288
        %p290 = scmp.lt.s32.totalorder %s22, 1
        %s291 = scalar_select %p290, %s22, 1
        %p292 = scmp.lt.s32.totalorder %s289, 31
        %s293 = scalar_select %p292, %s289, 31
        %s294 = smul.addr %s291, 32
        %s295 = sadd.s32 %s293, %s294
        %s296 = smul.addr %s295, 4
        %s297 = scalar_lea.vmem %s0, %s296
        %s298 = sadd.s32 %s23, %s24
        %s299 = smul.u32 32, %s298
      $region44: #{resnet_model_forward.1} parent=39 // pred_fallthru
        _
    $region40: #{resnet_model_forward.1} parent=5 // pred_fallthru
      _
    %p300 = scmp.le.s32.totalorder 1, %s15
    %p301 = scmp.lt.s32.totalorder %s15, 3
    %p302 = pnand %p300, %p301
    %p303 = pneg %p302
    // Predicated region
    $region45: #{resnet_model_forward.1} parent=5 // pred_check
      _
    $region46: #{resnet_model_forward.1} parent=5 // pred_check_branch
      %305 = sbr.rel (%p302) target = $region48
    $region47: #{resnet_model_forward.1} parent=5 // pred_region
      %s306 = ssub.s32 %s15, 1
      %s307 = sadd.s32 %s26, %s27
      %s308 = smul.u32 32, %s307
      %p309 = scmp.lt.s32.totalorder %s25, 1
      %s310 = scalar_select %p309, %s25, 1
      %p311 = scmp.lt.s32.totalorder %s308, 31
      %s312 = scalar_select %p311, %s308, 31
      %s313 = smul.addr %s310, 32
      %s314 = sadd.s32 %s312, %s313
      %s315 = smul.addr %s314, 4
      %s316 = scalar_lea.vmem %s0, %s315
      %p317 = pneg %p64
      %p318 = pneg %p61
      %p319 = pneg %p85
      %p320 = pneg %p82
      %p321 = pneg %p106
      %p322 = pneg %p103
      %p323 = pneg %p127
      %p324 = pneg %p124
      %p325 = pneg %p148
      %p326 = pneg %p145
      %p327 = pneg %p169
      %p328 = pneg %p166
      %p329 = pneg %p190
      %p330 = pneg %p187
      %p331 = pneg %p220
      %p332 = pneg %p217
      %s333 = sadd.s32 %s26, %s27
      %s334 = smul.u32 32, %s333
      %p335 = scmp.lt.s32.totalorder %s25, 1
      %s336 = scalar_select %p335, %s25, 1
      %p337 = scmp.lt.s32.totalorder %s334, 31
      %s338 = scalar_select %p337, %s334, 31
      %s339 = smul.addr %s336, 32
      %s340 = sadd.s32 %s338, %s339
      %s341 = smul.addr %s340, 8
      %s342 = scalar_lea.vmem %s7, %s341
      %p343 = pneg %p248
      %p344 = pneg %p245
      %p345 = scmp.lt.s32.totalorder %s25, 1
      %s346 = scalar_select %p345, %s25, 1
      %p347 = scmp.lt.s32.totalorder %s26, 0
      %s348 = scalar_select %p347, %s26, 0
      %s349 = sadd.s32 %s348, %s346
      %s350 = scalar_lea.vmem %s8, %s349
      %s351 = sadd.s32 %s26, %s27
      %s352 = smul.u32 32, %s351
      %p353 = scmp.lt.s32.totalorder %s25, 1
      %s354 = scalar_select %p353, %s25, 1
      %p355 = scmp.lt.s32.totalorder %s352, 31
      %s356 = scalar_select %p355, %s352, 31
      %s357 = smul.addr %s354, 32
      %s358 = sadd.s32 %s356, %s357
      %s359 = smul.addr %s358, 4
      %s360 = scalar_lea.vmem %s0, %s359
      %s361 = sadd.s32 %s26, %s27
      %s362 = smul.u32 32, %s361
      %s363 = sadd.s32 %s26, %s27
      %s364 = smul.u32 32, %s363
      %p365 = scmp.lt.s32.totalorder %s25, 1
      %s366 = scalar_select %p365, %s25, 1
      %p367 = scmp.lt.s32.totalorder %s364, 31
      %s368 = scalar_select %p367, %s364, 31
      %s369 = smul.addr %s366, 32
      %s370 = sadd.s32 %s368, %s369
      %s371 = smul.addr %s370, 8
      %s372 = scalar_lea.vmem %s7, %s371
      %s373 = sadd.s32 %s26, %s27
      %s374 = smul.u32 32, %s373
      %p375 = scmp.lt.s32.totalorder %s25, 1
      %s376 = scalar_select %p375, %s25, 1
      %p377 = scmp.lt.s32.totalorder %s26, 0
      %s378 = scalar_select %p377, %s26, 0
      %s379 = sadd.s32 %s378, %s376
      %s380 = scalar_lea.vmem %s8, %s379
      %v381 = vld [vmem:[%s360] sm:$0xf]
      %v382 = vld [vmem:[%s360 + $0x4] sm:$0xf]
      %v383 = vld [vmem:[%s360 + $0x8] sm:$0xf]
      %v384 = vld [vmem:[%s360 + $0xc] sm:$0xf]
      %v385 = vld [vmem:[%s360 + $0x10] sm:$0xf]
      %v386 = vld [vmem:[%s360 + $0x14] sm:$0xf]
      %v387 = vld [vmem:[%s360 + $0x18] sm:$0xf]
      %v388 = vld [vmem:[%s360 + $0x1c] sm:$0xf]
      %v389 = vld [vmem:[%s360 + $0x20] sm:$0xf]
      %v390 = vld [vmem:[%s360 + $0x24] sm:$0xf]
      %v391 = vld [vmem:[%s360 + $0x28] sm:$0xf]
      %v392 = vld [vmem:[%s360 + $0x2c] sm:$0xf]
      %v393 = vld [vmem:[%s360 + $0x30] sm:$0xf]
      %v394 = vld [vmem:[%s360 + $0x34] sm:$0xf]
      %v395 = vld [vmem:[%s360 + $0x38] sm:$0xf]
      %v396 = vld [vmem:[%s360 + $0x3c] sm:$0xf]
      %v397 = vld [vmem:[%s360 + $0x40] sm:$0xf]
      %v398 = vld [vmem:[%s360 + $0x44] sm:$0xf]
      %v399 = vld [vmem:[%s360 + $0x48] sm:$0xf]
      %v400 = vld [vmem:[%s360 + $0x4c] sm:$0xf]
      %v401 = vld [vmem:[%s360 + $0x50] sm:$0xf]
      %v402 = vld [vmem:[%s360 + $0x54] sm:$0xf]
      %v403 = vld [vmem:[%s360 + $0x58] sm:$0xf]
      %v404 = vld [vmem:[%s360 + $0x5c] sm:$0xf]
      %v405 = vld [vmem:[%s360 + $0x60] sm:$0xf]
      %v406 = vld [vmem:[%s360 + $0x64] sm:$0xf]
      %v407 = vld [vmem:[%s360 + $0x68] sm:$0xf]
      %v408 = vld [vmem:[%s360 + $0x6c] sm:$0xf]
      %v409 = vld [vmem:[%s360 + $0x70] sm:$0xf]
      %v410 = vld [vmem:[%s360 + $0x74] sm:$0xf]
      %v411 = vld [vmem:[%s360 + $0x78] sm:$0xf]
      %v412 = vld [vmem:[%s360 + $0x7c] sm:$0xf]
      %v413 = vld [vmem:[%s1] sm:$0xf]
      %v414 = vld [vmem:[%s1 + $0x4] sm:$0xf]
      %v415 = vld [vmem:[%s1 + $0x8] sm:$0xf]
      %v416 = vld [vmem:[%s1 + $0xc] sm:$0xf]
      %v417 = vld [vmem:[%s1 + $0x10] sm:$0xf]
      %v418 = vld [vmem:[%s1 + $0x14] sm:$0xf]
      %v419 = vld [vmem:[%s1 + $0x18] sm:$0xf]
      %v420 = vld [vmem:[%s1 + $0x1c] sm:$0xf]
      %v421 = vld [vmem:[%s1 + $0x20] sm:$0xf]
      %v422 = vld [vmem:[%s1 + $0x24] sm:$0xf]
      %v423 = vld [vmem:[%s1 + $0x28] sm:$0xf]
      %v424 = vld [vmem:[%s1 + $0x2c] sm:$0xf]
      %v425 = vld [vmem:[%s1 + $0x30] sm:$0xf]
      %v426 = vld [vmem:[%s1 + $0x34] sm:$0xf]
      %v427 = vld [vmem:[%s1 + $0x38] sm:$0xf]
      %v428 = vld [vmem:[%s1 + $0x3c] sm:$0xf]
      %v429 = vld [vmem:[%s2] sm:$0x1]
      %v431 = vperm.slane %v429, 0
      %v465 = vunpack.c.l.b16 %v381
      %v466 = vunpack.c.l.b16 %v382
      %v467 = vunpack.c.l.b16 %v383
      %v468 = vunpack.c.l.b16 %v384
      %v469 = vunpack.c.l.b16 %v385
      %v470 = vunpack.c.l.b16 %v386
      %v471 = vunpack.c.l.b16 %v387
      %v472 = vunpack.c.l.b16 %v388
      %v473 = vunpack.c.l.b16 %v389
      %v474 = vunpack.c.l.b16 %v390
      %v475 = vunpack.c.l.b16 %v391
      %v476 = vunpack.c.l.b16 %v392
      %v477 = vunpack.c.l.b16 %v393
      %v478 = vunpack.c.l.b16 %v394
      %v479 = vunpack.c.l.b16 %v395
      %v480 = vunpack.c.l.b16 %v396
      %v481 = vunpack.c.l.b16 %v397
      %v482 = vunpack.c.l.b16 %v398
      %v483 = vunpack.c.l.b16 %v399
      %v484 = vunpack.c.l.b16 %v400
      %v485 = vunpack.c.l.b16 %v401
      %v486 = vunpack.c.l.b16 %v402
      %v487 = vunpack.c.l.b16 %v403
      %v488 = vunpack.c.l.b16 %v404
      %v489 = vunpack.c.l.b16 %v405
      %v490 = vunpack.c.l.b16 %v406
      %v491 = vunpack.c.l.b16 %v407
      %v492 = vunpack.c.l.b16 %v408
      %v493 = vunpack.c.l.b16 %v409
      %v494 = vunpack.c.l.b16 %v410
      %v495 = vunpack.c.l.b16 %v411
      %v496 = vunpack.c.l.b16 %v412
      %v497 = vpack.c.b16 %v466, %v465
      %v498 = vpack.c.b16 %v468, %v467
      %v499 = vpack.c.b16 %v470, %v469
      %v500 = vpack.c.b16 %v472, %v471
      %v501 = vpack.c.b16 %v474, %v473
      %v502 = vpack.c.b16 %v476, %v475
      %v503 = vpack.c.b16 %v478, %v477
      %v504 = vpack.c.b16 %v480, %v479
      %v505 = vpack.c.b16 %v482, %v481
      %v506 = vpack.c.b16 %v484, %v483
      %v507 = vpack.c.b16 %v486, %v485
      %v508 = vpack.c.b16 %v488, %v487
      %v509 = vpack.c.b16 %v490, %v489
      %v510 = vpack.c.b16 %v492, %v491
      %v511 = vpack.c.b16 %v494, %v493
      %v512 = vpack.c.b16 %v496, %v495
      %v545 = vunpack.c.l.b16 %v413
      %v546 = vunpack.c.l.b16 %v414
      %v547 = vunpack.c.l.b16 %v415
      %v548 = vunpack.c.l.b16 %v416
      %v549 = vunpack.c.l.b16 %v417
      %v550 = vunpack.c.l.b16 %v418
      %v551 = vunpack.c.l.b16 %v419
      %v552 = vunpack.c.l.b16 %v420
      %v553 = vunpack.c.l.b16 %v421
      %v554 = vunpack.c.l.b16 %v422
      %v555 = vunpack.c.l.b16 %v423
      %v556 = vunpack.c.l.b16 %v424
      %v557 = vunpack.c.l.b16 %v425
      %v558 = vunpack.c.l.b16 %v426
      %v559 = vunpack.c.l.b16 %v427
      %v560 = vunpack.c.l.b16 %v428
      %v561 = vpack.c.b16 %v546, %v545
      %v562 = vpack.c.b16 %v548, %v547
      %v563 = vpack.c.b16 %v550, %v549
      %v564 = vpack.c.b16 %v552, %v551
      %v565 = vpack.c.b16 %v554, %v553
      %v566 = vpack.c.b16 %v556, %v555
      %v567 = vpack.c.b16 %v558, %v557
      %v568 = vpack.c.b16 %v560, %v559
      %577 = vmatpush.bf16.msra.mxu0 %v568
      %578 = vmatpush.bf16.msra.mxu0 %v567
      %579 = vmatpush.bf16.msra.mxu0 %v566
      %580 = vmatpush.bf16.msra.mxu0 %v565
      %581 = vmatpush.bf16.msra.mxu0 %v564
      %582 = vmatpush.bf16.msra.mxu0 %v563
      %583 = vmatpush.bf16.msra.mxu0 %v562
      %584 = vmatpush.bf16.msra.mxu0 %v561
      %585 = vmatmul.bf16.gmra.mxu0 %v497
      %v586 = vpop.f32.mrf.mxu0
      %v587 = vadd.f32 %v431, %v586
      %v588 = vpop.f32.mrf.mxu0
      %v589 = vadd.f32 %v431, %v588
      %590 = vmatmul.bf16.gmra.mxu0 %v498
      %v591 = vpop.f32.mrf.mxu0
      %v592 = vadd.f32 %v431, %v591
      %v593 = vpop.f32.mrf.mxu0
      %v594 = vadd.f32 %v431, %v593
      %595 = vmatmul.bf16.gmra.mxu0 %v499
      %v596 = vpop.f32.mrf.mxu0
      %v597 = vadd.f32 %v431, %v596
      %v598 = vpop.f32.mrf.mxu0
      %v599 = vadd.f32 %v431, %v598
      %600 = vmatmul.bf16.gmra.mxu0 %v500
      %v601 = vpop.f32.mrf.mxu0
      %v602 = vadd.f32 %v431, %v601
      %v603 = vpop.f32.mrf.mxu0
      %v604 = vadd.f32 %v431, %v603
      %605 = vmatmul.bf16.gmra.mxu0 %v501
      %v606 = vpop.f32.mrf.mxu0
      %v607 = vadd.f32 %v431, %v606
      %v608 = vpop.f32.mrf.mxu0
      %v609 = vadd.f32 %v431, %v608
      %610 = vmatmul.bf16.gmra.mxu0 %v502
      %v611 = vpop.f32.mrf.mxu0
      %v612 = vadd.f32 %v431, %v611
      %v613 = vpop.f32.mrf.mxu0
      %v614 = vadd.f32 %v431, %v613
      %615 = vmatmul.bf16.gmra.mxu0 %v503
      %v616 = vpop.f32.mrf.mxu0
      %v617 = vadd.f32 %v431, %v616
      %v618 = vpop.f32.mrf.mxu0
      %v619 = vadd.f32 %v431, %v618
      %620 = vmatmul.bf16.gmra.mxu0 %v504
      %v621 = vpop.f32.mrf.mxu0
      %v622 = vadd.f32 %v431, %v621
      %v623 = vpop.f32.mrf.mxu0
      %v624 = vadd.f32 %v431, %v623
      %625 = vmatmul.bf16.gmra.mxu0 %v505
      %v626 = vpop.f32.mrf.mxu0
      %v627 = vadd.f32 %v431, %v626
      %v628 = vpop.f32.mrf.mxu0
      %v629 = vadd.f32 %v431, %v628
      %630 = vmatmul.bf16.gmra.mxu0 %v506
      %v631 = vpop.f32.mrf.mxu0
      %v632 = vadd.f32 %v431, %v631
      %v633 = vpop.f32.mrf.mxu0
      %v634 = vadd.f32 %v431, %v633
      %635 = vmatmul.bf16.gmra.mxu0 %v507
      %v636 = vpop.f32.mrf.mxu0
      %v637 = vadd.f32 %v431, %v636
      %v638 = vpop.f32.mrf.mxu0
      %v639 = vadd.f32 %v431, %v638
      %640 = vmatmul.bf16.gmra.mxu0 %v508
      %v641 = vpop.f32.mrf.mxu0
      %v642 = vadd.f32 %v431, %v641
      %v643 = vpop.f32.mrf.mxu0
      %v644 = vadd.f32 %v431, %v643
      %645 = vmatmul.bf16.gmra.mxu0 %v509
      %v646 = vpop.f32.mrf.mxu0
      %v647 = vadd.f32 %v431, %v646
      %v648 = vpop.f32.mrf.mxu0
      %v649 = vadd.f32 %v431, %v648
      %650 = vmatmul.bf16.gmra.mxu0 %v510
      %v651 = vpop.f32.mrf.mxu0
      %v652 = vadd.f32 %v431, %v651
      %v653 = vpop.f32.mrf.mxu0
      %v654 = vadd.f32 %v431, %v653
      %655 = vmatmul.bf16.gmra.mxu0 %v511
      %v656 = vpop.f32.mrf.mxu0
      %v657 = vadd.f32 %v431, %v656
      %v658 = vpop.f32.mrf.mxu0
      %v659 = vadd.f32 %v431, %v658
      %660 = vmatmul.bf16.gmra.mxu0 %v512
      %v661 = vpop.f32.mrf.mxu0
      %v662 = vadd.f32 %v431, %v661
      %v663 = vpop.f32.mrf.mxu0
      %v664 = vadd.f32 %v431, %v663
      %665 = vdwg.mxu0
      %v666 = vmax.f32 %v587, 0.0
      %v667 = vmax.f32 %v589, 0.0
      %v668 = vmax.f32 %v592, 0.0
      %v669 = vmax.f32 %v594, 0.0
      %v670 = vmax.f32 %v597, 0.0
      %v671 = vmax.f32 %v599, 0.0
      %v672 = vmax.f32 %v602, 0.0
      %v673 = vmax.f32 %v604, 0.0
      %v674 = vmax.f32 %v607, 0.0
      %v675 = vmax.f32 %v609, 0.0
      %v676 = vmax.f32 %v612, 0.0
      %v677 = vmax.f32 %v614, 0.0
      %v678 = vmax.f32 %v617, 0.0
      %v679 = vmax.f32 %v619, 0.0
      %v680 = vmax.f32 %v622, 0.0
      %v681 = vmax.f32 %v624, 0.0
      %v682 = vmax.f32 %v627, 0.0
      %v683 = vmax.f32 %v629, 0.0
      %v684 = vmax.f32 %v632, 0.0
      %v685 = vmax.f32 %v634, 0.0
      %v686 = vmax.f32 %v637, 0.0
      %v687 = vmax.f32 %v639, 0.0
      %v688 = vmax.f32 %v642, 0.0
      %v689 = vmax.f32 %v644, 0.0
      %v690 = vmax.f32 %v647, 0.0
      %v691 = vmax.f32 %v649, 0.0
      %v692 = vmax.f32 %v652, 0.0
      %v693 = vmax.f32 %v654, 0.0
      %v694 = vmax.f32 %v657, 0.0
      %v695 = vmax.f32 %v659, 0.0
      %v696 = vmax.f32 %v662, 0.0
      %v697 = vmax.f32 %v664, 0.0
      %v698 = vpack.c.bf16 %v667, %v666
      %v699 = vpack.c.bf16 %v669, %v668
      %v700 = vpack.c.bf16 %v671, %v670
      %v701 = vpack.c.bf16 %v673, %v672
      %v702 = vpack.c.bf16 %v675, %v674
      %v703 = vpack.c.bf16 %v677, %v676
      %v704 = vpack.c.bf16 %v679, %v678
      %v705 = vpack.c.bf16 %v681, %v680
      %v706 = vpack.c.bf16 %v683, %v682
      %v707 = vpack.c.bf16 %v685, %v684
      %v708 = vpack.c.bf16 %v687, %v686
      %v709 = vpack.c.bf16 %v689, %v688
      %v710 = vpack.c.bf16 %v691, %v690
      %v711 = vpack.c.bf16 %v693, %v692
      %v712 = vpack.c.bf16 %v695, %v694
      %v713 = vpack.c.bf16 %v697, %v696
      %v714 = vld [vmem:[%s3] sm:$0xf]
      %v715 = vld [vmem:[%s3 + $0x4] sm:$0xf]
      %v716 = vld [vmem:[%s3 + $0x8] sm:$0xf]
      %v717 = vld [vmem:[%s3 + $0xc] sm:$0xf]
      %v718 = vld [vmem:[%s3 + $0x10] sm:$0xf]
      %v719 = vld [vmem:[%s3 + $0x14] sm:$0xf]
      %v720 = vld [vmem:[%s3 + $0x18] sm:$0xf]
      %v721 = vld [vmem:[%s3 + $0x1c] sm:$0xf]
      %v722 = vld [vmem:[%s3 + $0x20] sm:$0xf]
      %v723 = vld [vmem:[%s3 + $0x24] sm:$0xf]
      %v724 = vld [vmem:[%s3 + $0x28] sm:$0xf]
      %v725 = vld [vmem:[%s3 + $0x2c] sm:$0xf]
      %v726 = vld [vmem:[%s3 + $0x30] sm:$0xf]
      %v727 = vld [vmem:[%s3 + $0x34] sm:$0xf]
      %v728 = vld [vmem:[%s3 + $0x38] sm:$0xf]
      %v729 = vld [vmem:[%s3 + $0x3c] sm:$0xf]
      %v730 = vld [vmem:[%s4] sm:$0x1]
      %v732 = vperm.slane %v730, 0
      %v750 = vunpack.c.l.b16 %v714
      %v751 = vunpack.c.l.b16 %v715
      %v752 = vunpack.c.l.b16 %v716
      %v753 = vunpack.c.l.b16 %v717
      %v754 = vunpack.c.l.b16 %v718
      %v755 = vunpack.c.l.b16 %v719
      %v756 = vunpack.c.l.b16 %v720
      %v757 = vunpack.c.l.b16 %v721
      %v758 = vunpack.c.l.b16 %v722
      %v759 = vunpack.c.l.b16 %v723
      %v760 = vunpack.c.l.b16 %v724
      %v761 = vunpack.c.l.b16 %v725
      %v762 = vunpack.c.l.b16 %v726
      %v763 = vunpack.c.l.b16 %v727
      %v764 = vunpack.c.l.b16 %v728
      %v765 = vunpack.c.l.b16 %v729
      %v766 = vpack.c.b16 %v751, %v750
      %v767 = vpack.c.b16 %v753, %v752
      %v768 = vpack.c.b16 %v755, %v754
      %v769 = vpack.c.b16 %v757, %v756
      %v770 = vpack.c.b16 %v759, %v758
      %v771 = vpack.c.b16 %v761, %v760
      %v772 = vpack.c.b16 %v763, %v762
      %v773 = vpack.c.b16 %v765, %v764
      %782 = vmatpush.bf16.msra.mxu0 %v773
      %783 = vmatpush.bf16.msra.mxu0 %v772
      %784 = vmatpush.bf16.msra.mxu0 %v771
      %785 = vmatpush.bf16.msra.mxu0 %v770
      %786 = vmatpush.bf16.msra.mxu0 %v769
      %787 = vmatpush.bf16.msra.mxu0 %v768
      %788 = vmatpush.bf16.msra.mxu0 %v767
      %789 = vmatpush.bf16.msra.mxu0 %v766
      %790 = vmatmul.bf16.gmra.mxu0 %v698
      %v791 = vpop.f32.mrf.mxu0
      %v792 = vadd.f32 %v732, %v791
      %v793 = vpop.f32.mrf.mxu0
      %v794 = vadd.f32 %v732, %v793
      %795 = vmatmul.bf16.gmra.mxu0 %v699
      %v796 = vpop.f32.mrf.mxu0
      %v797 = vadd.f32 %v732, %v796
      %v798 = vpop.f32.mrf.mxu0
      %v799 = vadd.f32 %v732, %v798
      %800 = vmatmul.bf16.gmra.mxu0 %v700
      %v801 = vpop.f32.mrf.mxu0
      %v802 = vadd.f32 %v732, %v801
      %v803 = vpop.f32.mrf.mxu0
      %v804 = vadd.f32 %v732, %v803
      %805 = vmatmul.bf16.gmra.mxu0 %v701
      %v806 = vpop.f32.mrf.mxu0
      %v807 = vadd.f32 %v732, %v806
      %v808 = vpop.f32.mrf.mxu0
      %v809 = vadd.f32 %v732, %v808
      %810 = vmatmul.bf16.gmra.mxu0 %v702
      %v811 = vpop.f32.mrf.mxu0
      %v812 = vadd.f32 %v732, %v811
      %v813 = vpop.f32.mrf.mxu0
      %v814 = vadd.f32 %v732, %v813
      %815 = vmatmul.bf16.gmra.mxu0 %v703
      %v816 = vpop.f32.mrf.mxu0
      %v817 = vadd.f32 %v732, %v816
      %v818 = vpop.f32.mrf.mxu0
      %v819 = vadd.f32 %v732, %v818
      %820 = vmatmul.bf16.gmra.mxu0 %v704
      %v821 = vpop.f32.mrf.mxu0
      %v822 = vadd.f32 %v732, %v821
      %v823 = vpop.f32.mrf.mxu0
      %v824 = vadd.f32 %v732, %v823
      %825 = vmatmul.bf16.gmra.mxu0 %v705
      %v826 = vpop.f32.mrf.mxu0
      %v827 = vadd.f32 %v732, %v826
      %v828 = vpop.f32.mrf.mxu0
      %v829 = vadd.f32 %v732, %v828
      %830 = vmatmul.bf16.gmra.mxu0 %v706
      %v831 = vpop.f32.mrf.mxu0
      %v832 = vadd.f32 %v732, %v831
      %v833 = vpop.f32.mrf.mxu0
      %v834 = vadd.f32 %v732, %v833
      %835 = vmatmul.bf16.gmra.mxu0 %v707
      %v836 = vpop.f32.mrf.mxu0
      %v837 = vadd.f32 %v732, %v836
      %v838 = vpop.f32.mrf.mxu0
      %v839 = vadd.f32 %v732, %v838
      %840 = vmatmul.bf16.gmra.mxu0 %v708
      %v841 = vpop.f32.mrf.mxu0
      %v842 = vadd.f32 %v732, %v841
      %v843 = vpop.f32.mrf.mxu0
      %v844 = vadd.f32 %v732, %v843
      %845 = vmatmul.bf16.gmra.mxu0 %v709
      %v846 = vpop.f32.mrf.mxu0
      %v847 = vadd.f32 %v732, %v846
      %v848 = vpop.f32.mrf.mxu0
      %v849 = vadd.f32 %v732, %v848
      %850 = vmatmul.bf16.gmra.mxu0 %v710
      %v851 = vpop.f32.mrf.mxu0
      %v852 = vadd.f32 %v732, %v851
      %v853 = vpop.f32.mrf.mxu0
      %v854 = vadd.f32 %v732, %v853
      %855 = vmatmul.bf16.gmra.mxu0 %v711
      %v856 = vpop.f32.mrf.mxu0
      %v857 = vadd.f32 %v732, %v856
      %v858 = vpop.f32.mrf.mxu0
      %v859 = vadd.f32 %v732, %v858
      %860 = vmatmul.bf16.gmra.mxu0 %v712
      %v861 = vpop.f32.mrf.mxu0
      %v862 = vadd.f32 %v732, %v861
      %v863 = vpop.f32.mrf.mxu0
      %v864 = vadd.f32 %v732, %v863
      %865 = vmatmul.bf16.gmra.mxu0 %v713
      %v866 = vpop.f32.mrf.mxu0
      %v867 = vadd.f32 %v732, %v866
      %v868 = vpop.f32.mrf.mxu0
      %v869 = vadd.f32 %v732, %v868
      %870 = vdwg.mxu0
      %v871 = vmax.f32 %v792, 0.0
      %v872 = vmax.f32 %v794, 0.0
      %v873 = vmax.f32 %v797, 0.0
      %v874 = vmax.f32 %v799, 0.0
      %v875 = vmax.f32 %v802, 0.0
      %v876 = vmax.f32 %v804, 0.0
      %v877 = vmax.f32 %v807, 0.0
      %v878 = vmax.f32 %v809, 0.0
      %v879 = vmax.f32 %v812, 0.0
      %v880 = vmax.f32 %v814, 0.0
      %v881 = vmax.f32 %v817, 0.0
      %v882 = vmax.f32 %v819, 0.0
      %v883 = vmax.f32 %v822, 0.0
      %v884 = vmax.f32 %v824, 0.0
      %v885 = vmax.f32 %v827, 0.0
      %v886 = vmax.f32 %v829, 0.0
      %v887 = vmax.f32 %v832, 0.0
      %v888 = vmax.f32 %v834, 0.0
      %v889 = vmax.f32 %v837, 0.0
      %v890 = vmax.f32 %v839, 0.0
      %v891 = vmax.f32 %v842, 0.0
      %v892 = vmax.f32 %v844, 0.0
      %v893 = vmax.f32 %v847, 0.0
      %v894 = vmax.f32 %v849, 0.0
      %v895 = vmax.f32 %v852, 0.0
      %v896 = vmax.f32 %v854, 0.0
      %v897 = vmax.f32 %v857, 0.0
      %v898 = vmax.f32 %v859, 0.0
      %v899 = vmax.f32 %v862, 0.0
      %v900 = vmax.f32 %v864, 0.0
      %v901 = vmax.f32 %v867, 0.0
      %v902 = vmax.f32 %v869, 0.0
      %v903 = vpack.c.bf16 %v872, %v871
      %v904 = vpack.c.bf16 %v874, %v873
      %v905 = vpack.c.bf16 %v876, %v875
      %v906 = vpack.c.bf16 %v878, %v877
      %v907 = vpack.c.bf16 %v880, %v879
      %v908 = vpack.c.bf16 %v882, %v881
      %v909 = vpack.c.bf16 %v884, %v883
      %v910 = vpack.c.bf16 %v886, %v885
      %v911 = vpack.c.bf16 %v888, %v887
      %v912 = vpack.c.bf16 %v890, %v889
      %v913 = vpack.c.bf16 %v892, %v891
      %v914 = vpack.c.bf16 %v894, %v893
      %v915 = vpack.c.bf16 %v896, %v895
      %v916 = vpack.c.bf16 %v898, %v897
      %v917 = vpack.c.bf16 %v900, %v899
      %v918 = vpack.c.bf16 %v902, %v901
      %v919 = vld [vmem:[%s5] sm:$0xf]
      %v920 = vld [vmem:[%s5 + $0x4] sm:$0xf]
      %v921 = vld [vmem:[%s5 + $0x8] sm:$0xf]
      %v922 = vld [vmem:[%s5 + $0xc] sm:$0xf]
      %v923 = vld [vmem:[%s5 + $0x10] sm:$0xf]
      %v924 = vld [vmem:[%s5 + $0x14] sm:$0xf]
      %v925 = vld [vmem:[%s5 + $0x18] sm:$0xf]
      %v926 = vld [vmem:[%s5 + $0x1c] sm:$0xf]
      %v927 = vld [vmem:[%s5 + $0x20] sm:$0xf]
      %v928 = vld [vmem:[%s5 + $0x24] sm:$0xf]
      %v929 = vld [vmem:[%s5 + $0x28] sm:$0xf]
      %v930 = vld [vmem:[%s5 + $0x2c] sm:$0xf]
      %v931 = vld [vmem:[%s5 + $0x30] sm:$0xf]
      %v932 = vld [vmem:[%s5 + $0x34] sm:$0xf]
      %v933 = vld [vmem:[%s5 + $0x38] sm:$0xf]
      %v934 = vld [vmem:[%s5 + $0x3c] sm:$0xf]
      %v935 = vld [vmem:[%s6] sm:$0x1]
      %v937 = vperm.slane %v935, 0
      %v955 = vunpack.c.l.b16 %v919
      %v956 = vunpack.c.l.b16 %v920
      %v957 = vunpack.c.l.b16 %v921
      %v958 = vunpack.c.l.b16 %v922
      %v959 = vunpack.c.l.b16 %v923
      %v960 = vunpack.c.l.b16 %v924
      %v961 = vunpack.c.l.b16 %v925
      %v962 = vunpack.c.l.b16 %v926
      %v963 = vunpack.c.l.b16 %v927
      %v964 = vunpack.c.l.b16 %v928
      %v965 = vunpack.c.l.b16 %v929
      %v966 = vunpack.c.l.b16 %v930
      %v967 = vunpack.c.l.b16 %v931
      %v968 = vunpack.c.l.b16 %v932
      %v969 = vunpack.c.l.b16 %v933
      %v970 = vunpack.c.l.b16 %v934
      %v971 = vpack.c.b16 %v956, %v955
      %v972 = vpack.c.b16 %v958, %v957
      %v973 = vpack.c.b16 %v960, %v959
      %v974 = vpack.c.b16 %v962, %v961
      %v975 = vpack.c.b16 %v964, %v963
      %v976 = vpack.c.b16 %v966, %v965
      %v977 = vpack.c.b16 %v968, %v967
      %v978 = vpack.c.b16 %v970, %v969
      %987 = vmatpush.bf16.msra.mxu0 %v978
      %988 = vmatpush.bf16.msra.mxu0 %v977
      %989 = vmatpush.bf16.msra.mxu0 %v976
      %990 = vmatpush.bf16.msra.mxu0 %v975
      %991 = vmatpush.bf16.msra.mxu0 %v974
      %992 = vmatpush.bf16.msra.mxu0 %v973
      %993 = vmatpush.bf16.msra.mxu0 %v972
      %994 = vmatpush.bf16.msra.mxu0 %v971
      %995 = vmatmul.bf16.gmra.mxu0 %v903
      %v996 = vpop.f32.mrf.mxu0
      %v997 = vadd.f32 %v937, %v996
      %v998 = vpop.f32.mrf.mxu0
      %v999 = vadd.f32 %v937, %v998
      %1000 = vmatmul.bf16.gmra.mxu0 %v904
      %v1001 = vpop.f32.mrf.mxu0
      %v1002 = vadd.f32 %v937, %v1001
      %v1003 = vpop.f32.mrf.mxu0
      %v1004 = vadd.f32 %v937, %v1003
      %1005 = vmatmul.bf16.gmra.mxu0 %v905
      %v1006 = vpop.f32.mrf.mxu0
      %v1007 = vadd.f32 %v937, %v1006
      %v1008 = vpop.f32.mrf.mxu0
      %v1009 = vadd.f32 %v937, %v1008
      %1010 = vmatmul.bf16.gmra.mxu0 %v906
      %v1011 = vpop.f32.mrf.mxu0
      %v1012 = vadd.f32 %v937, %v1011
      %v1013 = vpop.f32.mrf.mxu0
      %v1014 = vadd.f32 %v937, %v1013
      %1015 = vmatmul.bf16.gmra.mxu0 %v907
      %v1016 = vpop.f32.mrf.mxu0
      %v1017 = vadd.f32 %v937, %v1016
      %v1018 = vpop.f32.mrf.mxu0
      %v1019 = vadd.f32 %v937, %v1018
      %1020 = vmatmul.bf16.gmra.mxu0 %v908
      %v1021 = vpop.f32.mrf.mxu0
      %v1022 = vadd.f32 %v937, %v1021
      %v1023 = vpop.f32.mrf.mxu0
      %v1024 = vadd.f32 %v937, %v1023
      %1025 = vmatmul.bf16.gmra.mxu0 %v909
      %v1026 = vpop.f32.mrf.mxu0
      %v1027 = vadd.f32 %v937, %v1026
      %v1028 = vpop.f32.mrf.mxu0
      %v1029 = vadd.f32 %v937, %v1028
      %1030 = vmatmul.bf16.gmra.mxu0 %v910
      %v1031 = vpop.f32.mrf.mxu0
      %v1032 = vadd.f32 %v937, %v1031
      %v1033 = vpop.f32.mrf.mxu0
      %v1034 = vadd.f32 %v937, %v1033
      %1035 = vmatmul.bf16.gmra.mxu0 %v911
      %v1036 = vpop.f32.mrf.mxu0
      %v1037 = vadd.f32 %v937, %v1036
      %v1038 = vpop.f32.mrf.mxu0
      %v1039 = vadd.f32 %v937, %v1038
      %1040 = vmatmul.bf16.gmra.mxu0 %v912
      %v1041 = vpop.f32.mrf.mxu0
      %v1042 = vadd.f32 %v937, %v1041
      %v1043 = vpop.f32.mrf.mxu0
      %v1044 = vadd.f32 %v937, %v1043
      %1045 = vmatmul.bf16.gmra.mxu0 %v913
      %v1046 = vpop.f32.mrf.mxu0
      %v1047 = vadd.f32 %v937, %v1046
      %v1048 = vpop.f32.mrf.mxu0
      %v1049 = vadd.f32 %v937, %v1048
      %1050 = vmatmul.bf16.gmra.mxu0 %v914
      %v1051 = vpop.f32.mrf.mxu0
      %v1052 = vadd.f32 %v937, %v1051
      %v1053 = vpop.f32.mrf.mxu0
      %v1054 = vadd.f32 %v937, %v1053
      %1055 = vmatmul.bf16.gmra.mxu0 %v915
      %v1056 = vpop.f32.mrf.mxu0
      %v1057 = vadd.f32 %v937, %v1056
      %v1058 = vpop.f32.mrf.mxu0
      %v1059 = vadd.f32 %v937, %v1058
      %1060 = vmatmul.bf16.gmra.mxu0 %v916
      %v1061 = vpop.f32.mrf.mxu0
      %v1062 = vadd.f32 %v937, %v1061
      %v1063 = vpop.f32.mrf.mxu0
      %v1064 = vadd.f32 %v937, %v1063
      %1065 = vmatmul.bf16.gmra.mxu0 %v917
      %v1066 = vpop.f32.mrf.mxu0
      %v1067 = vadd.f32 %v937, %v1066
      %v1068 = vpop.f32.mrf.mxu0
      %v1069 = vadd.f32 %v937, %v1068
      %1070 = vmatmul.bf16.gmra.mxu0 %v918
      %v1071 = vpop.f32.mrf.mxu0
      %v1072 = vadd.f32 %v937, %v1071
      %v1073 = vpop.f32.mrf.mxu0
      %v1074 = vadd.f32 %v937, %v1073
      %1075 = vdwg.mxu0
      %v1076 = vadd.f32 %v997, %v666
      %v1077 = vadd.f32 %v999, %v667
      %v1078 = vadd.f32 %v1002, %v668
      %v1079 = vadd.f32 %v1004, %v669
      %v1080 = vadd.f32 %v1007, %v670
      %v1081 = vadd.f32 %v1009, %v671
      %v1082 = vadd.f32 %v1012, %v672
      %v1083 = vadd.f32 %v1014, %v673
      %v1084 = vadd.f32 %v1017, %v674
      %v1085 = vadd.f32 %v1019, %v675
      %v1086 = vadd.f32 %v1022, %v676
      %v1087 = vadd.f32 %v1024, %v677
      %v1088 = vadd.f32 %v1027, %v678
      %v1089 = vadd.f32 %v1029, %v679
      %v1090 = vadd.f32 %v1032, %v680
      %v1091 = vadd.f32 %v1034, %v681
      %v1092 = vadd.f32 %v1037, %v682
      %v1093 = vadd.f32 %v1039, %v683
      %v1094 = vadd.f32 %v1042, %v684
      %v1095 = vadd.f32 %v1044, %v685
      %v1096 = vadd.f32 %v1047, %v686
      %v1097 = vadd.f32 %v1049, %v687
      %v1098 = vadd.f32 %v1052, %v688
      %v1099 = vadd.f32 %v1054, %v689
      %v1100 = vadd.f32 %v1057, %v690
      %v1101 = vadd.f32 %v1059, %v691
      %v1102 = vadd.f32 %v1062, %v692
      %v1103 = vadd.f32 %v1064, %v693
      %v1104 = vadd.f32 %v1067, %v694
      %v1105 = vadd.f32 %v1069, %v695
      %v1106 = vadd.f32 %v1072, %v696
      %v1107 = vadd.f32 %v1074, %v697
      %v1108 = vmax.f32 %v1076, 0.0
      %v1109 = vmax.f32 %v1077, 0.0
      %v1110 = vmax.f32 %v1078, 0.0
      %v1111 = vmax.f32 %v1079, 0.0
      %v1112 = vmax.f32 %v1080, 0.0
      %v1113 = vmax.f32 %v1081, 0.0
      %v1114 = vmax.f32 %v1082, 0.0
      %v1115 = vmax.f32 %v1083, 0.0
      %v1116 = vmax.f32 %v1084, 0.0
      %v1117 = vmax.f32 %v1085, 0.0
      %v1118 = vmax.f32 %v1086, 0.0
      %v1119 = vmax.f32 %v1087, 0.0
      %v1120 = vmax.f32 %v1088, 0.0
      %v1121 = vmax.f32 %v1089, 0.0
      %v1122 = vmax.f32 %v1090, 0.0
      %v1123 = vmax.f32 %v1091, 0.0
      %v1124 = vmax.f32 %v1092, 0.0
      %v1125 = vmax.f32 %v1093, 0.0
      %v1126 = vmax.f32 %v1094, 0.0
      %v1127 = vmax.f32 %v1095, 0.0
      %v1128 = vmax.f32 %v1096, 0.0
      %v1129 = vmax.f32 %v1097, 0.0
      %v1130 = vmax.f32 %v1098, 0.0
      %v1131 = vmax.f32 %v1099, 0.0
      %v1132 = vmax.f32 %v1100, 0.0
      %v1133 = vmax.f32 %v1101, 0.0
      %v1134 = vmax.f32 %v1102, 0.0
      %v1135 = vmax.f32 %v1103, 0.0
      %v1136 = vmax.f32 %v1104, 0.0
      %v1137 = vmax.f32 %v1105, 0.0
      %v1138 = vmax.f32 %v1106, 0.0
      %v1139 = vmax.f32 %v1107, 0.0
      %1140 = vst [vmem:[%s372] sm:$0xff] %v1108
      %1141 = vst [vmem:[%s372 + $0x8] sm:$0xff] %v1109
      %1142 = vst [vmem:[%s372 + $0x10] sm:$0xff] %v1110
      %1143 = vst [vmem:[%s372 + $0x18] sm:$0xff] %v1111
      %1144 = vst [vmem:[%s372 + $0x20] sm:$0xff] %v1112
      %1145 = vst [vmem:[%s372 + $0x28] sm:$0xff] %v1113
      %1146 = vst [vmem:[%s372 + $0x30] sm:$0xff] %v1114
      %1147 = vst [vmem:[%s372 + $0x38] sm:$0xff] %v1115
      %1148 = vst [vmem:[%s372 + $0x40] sm:$0xff] %v1116
      %1149 = vst [vmem:[%s372 + $0x48] sm:$0xff] %v1117
      %1150 = vst [vmem:[%s372 + $0x50] sm:$0xff] %v1118
      %1151 = vst [vmem:[%s372 + $0x58] sm:$0xff] %v1119
      %1152 = vst [vmem:[%s372 + $0x60] sm:$0xff] %v1120
      %1153 = vst [vmem:[%s372 + $0x68] sm:$0xff] %v1121
      %1154 = vst [vmem:[%s372 + $0x70] sm:$0xff] %v1122
      %1155 = vst [vmem:[%s372 + $0x78] sm:$0xff] %v1123
      %1156 = vst [vmem:[%s372 + $0x80] sm:$0xff] %v1124
      %1157 = vst [vmem:[%s372 + $0x88] sm:$0xff] %v1125
      %1158 = vst [vmem:[%s372 + $0x90] sm:$0xff] %v1126
      %1159 = vst [vmem:[%s372 + $0x98] sm:$0xff] %v1127
      %1160 = vst [vmem:[%s372 + $0xa0] sm:$0xff] %v1128
      %1161 = vst [vmem:[%s372 + $0xa8] sm:$0xff] %v1129
      %1162 = vst [vmem:[%s372 + $0xb0] sm:$0xff] %v1130
      %1163 = vst [vmem:[%s372 + $0xb8] sm:$0xff] %v1131
      %1164 = vst [vmem:[%s372 + $0xc0] sm:$0xff] %v1132
      %1165 = vst [vmem:[%s372 + $0xc8] sm:$0xff] %v1133
      %1166 = vst [vmem:[%s372 + $0xd0] sm:$0xff] %v1134
      %1167 = vst [vmem:[%s372 + $0xd8] sm:$0xff] %v1135
      %1168 = vst [vmem:[%s372 + $0xe0] sm:$0xff] %v1136
      %1169 = vst [vmem:[%s372 + $0xe8] sm:$0xff] %v1137
      %1170 = vst [vmem:[%s372 + $0xf0] sm:$0xff] %v1138
      %1171 = vst [vmem:[%s372 + $0xf8] sm:$0xff] %v1139
      %p1172 = scmp.eq.s32.totalorder %s27, 0
      // Predicated region
      $region49: #{resnet_model_forward.1} parent=47 // pred_check
        %p1173 = pneg %p1172
      $region50: #{resnet_model_forward.1} parent=47 // pred_check_branch
        %1175 = sbr.rel (%p1173) target = $region52
      $region51: #{resnet_model_forward.1} parent=47 // pred_region
        %1176 = vst [vmem:[#allocation2] sm:$0x1] 0.0
      $region52: #{resnet_model_forward.1} parent=47 // pred_fallthru
        _
      %v1177 = vld [vmem:[#allocation2] sm:$0x1]
      %v1178 = vadd.f32 %v1108, %v1109
      %v1179 = vadd.f32 %v1178, %v1110
      %v1180 = vadd.f32 %v1179, %v1111
      %v1181 = vadd.f32 %v1180, %v1112
      %v1182 = vadd.f32 %v1181, %v1113
      %v1183 = vadd.f32 %v1182, %v1114
      %v1184 = vadd.f32 %v1183, %v1115
      %v1185 = vadd.f32 %v1184, %v1116
      %v1186 = vadd.f32 %v1185, %v1117
      %v1187 = vadd.f32 %v1186, %v1118
      %v1188 = vadd.f32 %v1187, %v1119
      %v1189 = vadd.f32 %v1188, %v1120
      %v1190 = vadd.f32 %v1189, %v1121
      %v1191 = vadd.f32 %v1190, %v1122
      %v1192 = vadd.f32 %v1191, %v1123
      %v1193 = vadd.f32 %v1192, %v1124
      %v1194 = vadd.f32 %v1193, %v1125
      %v1195 = vadd.f32 %v1194, %v1126
      %v1196 = vadd.f32 %v1195, %v1127
      %v1197 = vadd.f32 %v1196, %v1128
      %v1198 = vadd.f32 %v1197, %v1129
      %v1199 = vadd.f32 %v1198, %v1130
      %v1200 = vadd.f32 %v1199, %v1131
      %v1201 = vadd.f32 %v1200, %v1132
      %v1202 = vadd.f32 %v1201, %v1133
      %v1203 = vadd.f32 %v1202, %v1134
      %v1204 = vadd.f32 %v1203, %v1135
      %v1205 = vadd.f32 %v1204, %v1136
      %v1206 = vadd.f32 %v1205, %v1137
      %v1207 = vadd.f32 %v1206, %v1138
      %v1208 = vadd.f32 %v1207, %v1139
      %v1209 = vrot.slane %v1208, 4
      %v1210 = vadd.f32 %v1208, %v1209
      %v1211 = vrot.slane %v1210, 2
      %v1212 = vadd.f32 %v1210, %v1211
      %v1213 = vrot.slane %v1212, 1
      %v1214 = vadd.f32 %v1212, %v1213
      %v1215 = vadd.f32 %v1177, %v1214
      %1216 = vst [vmem:[#allocation2] sm:$0x1] %v1215
      // Predicated region
      $region53: #{resnet_model_forward.1} parent=47 // pred_check
        %p1217 = pneg %p1172
      $region54: #{resnet_model_forward.1} parent=47 // pred_check_branch
        %1219 = sbr.rel (%p1217) target = $region56
      $region55: #{resnet_model_forward.1} parent=47 // pred_region
        %v1220 = vld [vmem:[#allocation2] sm:$0x1]
        %v1221 = vmul.f32 %v1220, 0.00390625
        %1222 = vst [vmem:[%s380] sm:$0x1] %v1221
      $region56: #{resnet_model_forward.1} parent=47 // pred_fallthru
        _
      %s1223 = sadd.s32 %s26, %s27
      %s1224 = smul.u32 32, %s1223
      %p1225 = scmp.lt.s32.totalorder %s25, 1
      %s1226 = scalar_select %p1225, %s25, 1
      %p1227 = scmp.lt.s32.totalorder %s1224, 31
      %s1228 = scalar_select %p1227, %s1224, 31
      %s1229 = smul.addr %s1226, 32
      %s1230 = sadd.s32 %s1228, %s1229
      %s1231 = smul.addr %s1230, 8
      %s1232 = scalar_lea.vmem %s7, %s1231
      %p1233 = scmp.lt.s32.totalorder %s25, 1
      %s1234 = scalar_select %p1233, %s25, 1
      %p1235 = scmp.lt.s32.totalorder %s26, 0
      %s1236 = scalar_select %p1235, %s26, 0
      %s1237 = sadd.s32 %s1236, %s1234
      %s1238 = scalar_lea.vmem %s8, %s1237
      // Predicated region
      $region57: #{resnet_model_forward.1} parent=47 // pred_check
        %p1239 = pneg %p217
      $region58: #{resnet_model_forward.1} parent=47 // pred_check_branch
        %1241 = sbr.rel (%p1239) target = $region60
      $region59: #{resnet_model_forward.1} parent=47 // pred_region
        %s1242 = sadd.s32 %s26, %s27
        %s1243 = smul.u32 32, %s1242
      $region60: #{resnet_model_forward.1} parent=47 // pred_fallthru
        _
      // Predicated region
      $region61: #{resnet_model_forward.1} parent=47 // pred_check
        %p1244 = pneg %p245
      $region62: #{resnet_model_forward.1} parent=47 // pred_check_branch
        %1246 = sbr.rel (%p1244) target = $region64
      $region63: #{resnet_model_forward.1} parent=47 // pred_region
        _
      $region64: #{resnet_model_forward.1} parent=47 // pred_fallthru
        _
    $region48: #{resnet_model_forward.1} parent=5 // pred_fallthru
      _
    %p1247 = scmp.le.s32.totalorder 2, %s15
    // Predicated region
    $region65: #{resnet_model_forward.1} parent=5 // pred_check
      %p1248 = pneg %p1247
    $region66: #{resnet_model_forward.1} parent=5 // pred_check_branch
      %1250 = sbr.rel (%p1248) target = $region68
    $region67: #{resnet_model_forward.1} parent=5 // pred_region
      %s1251 = ssub.s32 %s15, 2
      // Predicated region
      $region69: #{resnet_model_forward.1} parent=67 // pred_check
        %p1252 = pneg %p223
      $region70: #{resnet_model_forward.1} parent=67 // pred_check_branch
        %1254 = sbr.rel (%p1252) target = $region72
      $region71: #{resnet_model_forward.1} parent=67 // pred_region
        %s1255 = sadd.s32 %s29, %s30
        %s1256 = smul.u32 32, %s1255
        %p1257 = scmp.lt.s32.totalorder %s28, 1
        %s1258 = scalar_select %p1257, %s28, 1
        %p1259 = scmp.lt.s32.totalorder %s1256, 31
        %s1260 = scalar_select %p1259, %s1256, 31
        %s1261 = smul.addr %s1258, 32
        %s1262 = sadd.s32 %s1260, %s1261
        %s1263 = smul.addr %s1262, 8
        %s1264 = scalar_lea.vmem %s7, %s1263
      $region72: #{resnet_model_forward.1} parent=67 // pred_fallthru
        _
      // Predicated region
      $region73: #{resnet_model_forward.1} parent=67 // pred_check
        %p1265 = pneg %p251
      $region74: #{resnet_model_forward.1} parent=67 // pred_check_branch
        %1267 = sbr.rel (%p1265) target = $region76
      $region75: #{resnet_model_forward.1} parent=67 // pred_region
        %p1268 = scmp.lt.s32.totalorder %s28, 1
        %s1269 = scalar_select %p1268, %s28, 1
        %p1270 = scmp.lt.s32.totalorder %s29, 0
        %s1271 = scalar_select %p1270, %s29, 0
        %s1272 = sadd.s32 %s1271, %s1269
        %s1273 = scalar_lea.vmem %s8, %s1272
      $region76: #{resnet_model_forward.1} parent=67 // pred_fallthru
        _
    $region68: #{resnet_model_forward.1} parent=5 // pred_fallthru
      _
  $region6: #{resnet_model_forward.1} parent=0 // loop_footer
    %s19 = sadd.s32 1, %s15
  $region7: #{resnet_model_forward.1} parent=0 // loop_footer_branch
    %14 = sbr.rel target = $region3
  $region8: #{resnet_model_forward.1} parent=0 // loop_exit
    _

</llo_original>
